<compile_context>
chip_gen: v5e
topology: v5e:2x2
jax: 0.10.0
libtpu: 0.0.40
codegen_flags: <defaults>
</compile_context>

<pallas_src>
import jax
import jax.numpy as jnp
from jax.experimental import pallas as pl
from jax.experimental.pallas import tpu as pltpu


def _distance_loss_kernel(xp_ref, yp_ref, xa_ref, ya_ref, o_ref):
    dx = xp_ref[...] - xa_ref[...]
    dy = yp_ref[...] - ya_ref[...]
    o_ref[...] = jnp.sqrt(dx * dx + dy * dy)


def _round_up(x, m):
    return ((x + m - 1) // m) * m


def distance_loss(x_pred, y_pred, x_actual, y_actual,
                  *, lane=512, target_block_bytes=2 << 20):
    """Elementwise sqrt((x_pred-x_actual)^2 + (y_pred-y_actual)^2).

    Accepts any shape/rank (all four inputs identical). Internally flattens,
    pads to a lane-dense (rows, lane) slab, and tiles rows with ~2 MiB blocks.
    """
    assert x_pred.shape == y_pred.shape == x_actual.shape == y_actual.shape
    assert x_pred.dtype == y_pred.dtype == x_actual.dtype == y_actual.dtype

    orig_shape = x_pred.shape
    dtype = x_pred.dtype
    itemsize = jnp.dtype(dtype).itemsize
    total = int(x_pred.size)

    # Rows of `lane` elements needed for the flattened data, sublane-aligned.
    min_rows = _round_up(pl.cdiv(total, lane), 8)

    # Rows per block: aim for ~target_block_bytes per array per block.
    tile_b = max(8, (target_block_bytes // (lane * itemsize)) // 8 * 8)
    tile_b = min(tile_b, min_rows)

    rows = _round_up(min_rows, tile_b)
    padded = rows * lane

    def prep(a):
        flat = a.reshape(-1)
        if padded != total:
            flat = jnp.pad(flat, (0, padded - total))
        return flat.reshape(rows, lane)

    xp, yp, xa, ya = (prep(a) for a in (x_pred, y_pred, x_actual, y_actual))

    grid = (rows // tile_b,)
    spec = pl.BlockSpec((tile_b, lane), lambda i: (i, 0))

    # 5 streams (4 in + 1 out) x double buffering x block, plus headroom.
    block_bytes = tile_b * lane * itemsize
    vmem_limit = min(48 << 20, max(32 << 20, 10 * block_bytes + (8 << 20)))

    out = pl.pallas_call(
        _distance_loss_kernel,
        out_shape=jax.ShapeDtypeStruct((rows, lane), dtype),
        grid_spec=pl.GridSpec(
            grid=grid,
            in_specs=[spec, spec, spec, spec],
            out_specs=spec,
        ),
        compiler_params=pltpu.CompilerParams(
            dimension_semantics=("parallel",),
            vmem_limit_bytes=vmem_limit,
        ),
        cost_estimate=pl.CostEstimate(
            flops=4 * padded,
            transcendentals=padded,
            bytes_accessed=5 * padded * itemsize,
        ),
    )(xp, yp, xa, ya)

    return out.reshape(-1)[:total].reshape(orig_shape)


if __name__ == "__main__":
    # DistanceLoss has no parameters; build deterministic small inputs.
    key = jax.random.PRNGKey(0)
    k1, k2, k3, k4 = jax.random.split(key, 4)

    # A small batch of (x, y) coordinate predictions; intentionally not
    # (8,128)-aligned to exercise the pad/flatten path.
    shape = (1000,)
    x_pred = jax.random.normal(k1, shape, dtype=jnp.float32)
    y_pred = jax.random.normal(k2, shape, dtype=jnp.float32)
    x_actual = jax.random.normal(k3, shape, dtype=jnp.float32)
    y_actual = jax.random.normal(k4, shape, dtype=jnp.float32)

    out = distance_loss(x_pred, y_pred, x_actual, y_actual)
    jax.block_until_ready(out)

    # Cross-check against a plain-JAX reference.
    ref = jnp.sqrt((x_pred - x_actual) ** 2 + (y_pred - y_actual) ** 2)
    assert out.shape == ref.shape and out.dtype == ref.dtype
    assert jnp.allclose(out, ref, atol=1e-6, rtol=1e-6)

    print("KERNEL_OK")
</pallas_src>

<mosaic_0001>
module attributes {stable_mosaic.version = 11 : i64} {
  func.func @_distance_loss_kernel(%arg0: i32, %arg1: memref<8x512xf32, #tpu.memory_space<vmem>>, %arg2: memref<8x512xf32, #tpu.memory_space<vmem>>, %arg3: memref<8x512xf32, #tpu.memory_space<vmem>>, %arg4: memref<8x512xf32, #tpu.memory_space<vmem>>, %arg5: memref<8x512xf32, #tpu.memory_space<vmem>>) attributes {dimension_semantics = [#tpu.dimension_semantics<parallel>], iteration_bounds = array<i64: 1>, scalar_prefetch = 0 : i64, scratch_operands = 0 : i64, tpu.core_type = #tpu.core_type<tc>, window_params = [{transform_indices = @transform_0, window_bounds = array<i64: 8, 512>}, {transform_indices = @transform_1, window_bounds = array<i64: 8, 512>}, {transform_indices = @transform_2, window_bounds = array<i64: 8, 512>}, {transform_indices = @transform_3, window_bounds = array<i64: 8, 512>}, {transform_indices = @transform_4, window_bounds = array<i64: 8, 512>}]} {
    %c0 = arith.constant 0 : index
    %c0_0 = arith.constant 0 : index
    %0 = vector.load %arg1[%c0, %c0_0] : memref<8x512xf32, #tpu.memory_space<vmem>>, vector<8x512xf32>
    %c0_1 = arith.constant 0 : index
    %c0_2 = arith.constant 0 : index
    %1 = vector.load %arg3[%c0_1, %c0_2] : memref<8x512xf32, #tpu.memory_space<vmem>>, vector<8x512xf32>
    %2 = arith.subf %0, %1 : vector<8x512xf32>
    %c0_3 = arith.constant 0 : index
    %c0_4 = arith.constant 0 : index
    %3 = vector.load %arg2[%c0_3, %c0_4] : memref<8x512xf32, #tpu.memory_space<vmem>>, vector<8x512xf32>
    %c0_5 = arith.constant 0 : index
    %c0_6 = arith.constant 0 : index
    %4 = vector.load %arg4[%c0_5, %c0_6] : memref<8x512xf32, #tpu.memory_space<vmem>>, vector<8x512xf32>
    %5 = arith.subf %3, %4 : vector<8x512xf32>
    %6 = arith.mulf %2, %2 : vector<8x512xf32>
    %7 = arith.mulf %5, %5 : vector<8x512xf32>
    %8 = arith.addf %6, %7 : vector<8x512xf32>
    %9 = math.sqrt %8 : vector<8x512xf32>
    %c0_7 = arith.constant 0 : index
    %c0_8 = arith.constant 0 : index
    %10 = vector.load %arg5[%c0_7, %c0_8] : memref<8x512xf32, #tpu.memory_space<vmem>>, vector<8x512xf32>
    tpu.vector_store %arg5[%c0_7, %c0_8], %9 {strides = array<i32>} : memref<8x512xf32, #tpu.memory_space<vmem>>, vector<8x512xf32>,
    return
  }
  func.func @transform_0(%arg0: i32) -> (i32, i32) {
    %c0_i32 = arith.constant 0 : i32
    %c0_i32_0 = arith.constant 0 : i32
    return %arg0, %c0_i32 : i32, i32
  }
  func.func @transform_1(%arg0: i32) -> (i32, i32) {
    %c0_i32 = arith.constant 0 : i32
    %c0_i32_0 = arith.constant 0 : i32
    return %arg0, %c0_i32 : i32, i32
  }
  func.func @transform_2(%arg0: i32) -> (i32, i32) {
    %c0_i32 = arith.constant 0 : i32
    %c0_i32_0 = arith.constant 0 : i32
    return %arg0, %c0_i32 : i32, i32
  }
  func.func @transform_3(%arg0: i32) -> (i32, i32) {
    %c0_i32 = arith.constant 0 : i32
    %c0_i32_0 = arith.constant 0 : i32
    return %arg0, %c0_i32 : i32, i32
  }
  func.func @transform_4(%arg0: i32) -> (i32, i32) {
    %c0_i32 = arith.constant 0 : i32
    %c0_i32_0 = arith.constant 0 : i32
    return %arg0, %c0_i32 : i32, i32
  }
}

</mosaic_0001>

<llo_original>
// kernel: tpu_custom_call.1
$region0: #{tpu_custom_call.1}
  #allocation0 [shape = 'u32[]', space=smem, size = 0x4, offset = 0x4, fixed_abs, tag = 'smem constant byte address 0x4 - core index']
  #allocation1 [shape = 'u32[72,128]{1,0:T(1,128)}', space=vmem, size = 0x9000, scoped, tag = 'internal scratch']
  %s0 = inlined_call_operand.hbm [shape: f32[8,512], index: 0, kind: input, shape index: {}]
  %s1 = inlined_call_operand.hbm [shape: f32[8,512], index: 1, kind: input, shape index: {}]
  %s2 = inlined_call_operand.hbm [shape: f32[8,512], index: 2, kind: input, shape index: {}]
  %s3 = inlined_call_operand.hbm [shape: f32[8,512], index: 3, kind: input, shape index: {}]
  %s4 = inlined_call_operand.hbm [shape: f32[8,512], index: 4, kind: output, shape index: {}]
  %s5 = sld [smem:[#allocation0]]
  $region42: #{tpu_custom_call.1} parent=0
    _
  %s7 = ssub.s32 1, %s5
  %s8 = scalar_select 0, %s7, %s5
  $region1: #{tpu_custom_call.1} parent=0
    #allocation2 [shape = 'u8[16384]{0}', space=vmem, size = 0x4000, scoped, tag = 'input window, operand 0, single buffered']
    #allocation3 [shape = 's32[1]{0}', space=sflag, size = 0x4, scoped, tag = 'scoped memory for tpu_custom_call.1']
    #allocation4 [shape = 's32[1]{0}', space=sflag, size = 0x4, scoped, tag = 'scoped memory for tpu_custom_call.1']
    #allocation5 [shape = 'u8[16384]{0}', space=vmem, size = 0x4000, scoped, tag = 'input window, operand 1, single buffered']
    #allocation6 [shape = 's32[1]{0}', space=sflag, size = 0x4, scoped, tag = 'scoped memory for tpu_custom_call.1']
    #allocation7 [shape = 'u8[16384]{0}', space=vmem, size = 0x4000, scoped, tag = 'input window, operand 2, single buffered']
    #allocation8 [shape = 'u8[16384]{0}', space=vmem, size = 0x4000, scoped, tag = 'input window, operand 3, single buffered']
    #allocation9 [shape = 's32[1]{0}', space=sflag, size = 0x4, scoped, tag = 'scoped memory for tpu_custom_call.1']
    #allocation10 [shape = 'u8[16384]{0}', space=vmem, size = 0x4000, scoped, tag = 'output window, operand 0, single buffered']
    %9 = vsyncpa [#allocation3], 0
    %10 = vsyncpa [#allocation6], 0
    %11 = vsyncpa [#allocation9], 0
    %12 = vsyncpa [#allocation4], 0
    // Predicated region
    $region2: #{tpu_custom_call.1} parent=1 // pred_check
      _
    $region3: #{tpu_custom_call.1} parent=1 // pred_check_branch
      %14 = sbr.rel (0) target = $region5
    $region4: #{tpu_custom_call.1} parent=1 // pred_region
      %16 = vsyncadd [#allocation3], 0
      %s18 = sshll.u32 %s0, 4
      %s19 = int_to_ptr.hbm [resolvable:$true] %s18
      %s20 = sshll.u32 [#allocation2], 4
      %s21 = int_to_ptr.vmem [resolvable:$true] %s20
      %23 = dma.hbm_to_vmem [thread:$0]  %s19, 512, %s21, [#allocation3]
    $region5: #{tpu_custom_call.1} parent=1 // pred_fallthru
      _
    // Predicated region
    $region6: #{tpu_custom_call.1} parent=1 // pred_check
      _
    $region7: #{tpu_custom_call.1} parent=1 // pred_check_branch
      %25 = sbr.rel (0) target = $region9
    $region8: #{tpu_custom_call.1} parent=1 // pred_region
      %27 = vsyncadd [#allocation6], 0
      %s29 = sshll.u32 %s1, 4
      %s30 = int_to_ptr.hbm [resolvable:$true] %s29
      %s31 = sshll.u32 [#allocation5], 4
      %s32 = int_to_ptr.vmem [resolvable:$true] %s31
      %34 = dma.hbm_to_vmem [thread:$0]  %s30, 512, %s32, [#allocation6]
    $region9: #{tpu_custom_call.1} parent=1 // pred_fallthru
      _
    // Predicated region
    $region10: #{tpu_custom_call.1} parent=1 // pred_check
      _
    $region11: #{tpu_custom_call.1} parent=1 // pred_check_branch
      %36 = sbr.rel (0) target = $region13
    $region12: #{tpu_custom_call.1} parent=1 // pred_region
      %38 = vsyncadd [#allocation6], 0
      %s40 = sshll.u32 %s2, 4
      %s41 = int_to_ptr.hbm [resolvable:$true] %s40
      %s42 = sshll.u32 [#allocation7], 4
      %s43 = int_to_ptr.vmem [resolvable:$true] %s42
      %45 = dma.hbm_to_vmem [thread:$0]  %s41, 512, %s43, [#allocation6]
    $region13: #{tpu_custom_call.1} parent=1 // pred_fallthru
      _
    // Predicated region
    $region14: #{tpu_custom_call.1} parent=1 // pred_check
      _
    $region15: #{tpu_custom_call.1} parent=1 // pred_check_branch
      %47 = sbr.rel (0) target = $region17
    $region16: #{tpu_custom_call.1} parent=1 // pred_region
      %49 = vsyncadd [#allocation9], 0
      %s51 = sshll.u32 %s3, 4
      %s52 = int_to_ptr.hbm [resolvable:$true] %s51
      %s53 = sshll.u32 [#allocation8], 4
      %s54 = int_to_ptr.vmem [resolvable:$true] %s53
      %56 = dma.hbm_to_vmem [thread:$0]  %s52, 512, %s54, [#allocation9]
    $region17: #{tpu_custom_call.1} parent=1 // pred_fallthru
      _
    // Predicated region
    $region18: #{tpu_custom_call.1} parent=1 // pred_check
      _
    $region19: #{tpu_custom_call.1} parent=1 // pred_check_branch
      %58 = sbr.rel (0) target = $region21
    $region20: #{tpu_custom_call.1} parent=1 // pred_region
      %60 = dma.done [#allocation3], 512
    $region21: #{tpu_custom_call.1} parent=1 // pred_fallthru
      _
    // Predicated region
    $region22: #{tpu_custom_call.1} parent=1 // pred_check
      _
    $region23: #{tpu_custom_call.1} parent=1 // pred_check_branch
      %62 = sbr.rel (0) target = $region25
    $region24: #{tpu_custom_call.1} parent=1 // pred_region
      %64 = dma.done [#allocation6], 512
    $region25: #{tpu_custom_call.1} parent=1 // pred_fallthru
      _
    // Predicated region
    $region26: #{tpu_custom_call.1} parent=1 // pred_check
      _
    $region27: #{tpu_custom_call.1} parent=1 // pred_check_branch
      %66 = sbr.rel (0) target = $region29
    $region28: #{tpu_custom_call.1} parent=1 // pred_region
      %68 = dma.done [#allocation6], 512
    $region29: #{tpu_custom_call.1} parent=1 // pred_fallthru
      _
    // Predicated region
    $region30: #{tpu_custom_call.1} parent=1 // pred_check
      _
    $region31: #{tpu_custom_call.1} parent=1 // pred_check_branch
      %70 = sbr.rel (0) target = $region33
    $region32: #{tpu_custom_call.1} parent=1 // pred_region
      %72 = dma.done [#allocation9], 512
    $region33: #{tpu_custom_call.1} parent=1 // pred_fallthru
      _
    %v73 = vld [vmem:[#allocation2] sm:$0xff]
    %v74 = vld [vmem:[#allocation2 + $0x8] sm:$0xff]
    %v75 = vld [vmem:[#allocation2 + $0x10] sm:$0xff]
    %v76 = vld [vmem:[#allocation2 + $0x18] sm:$0xff]
    %v77 = vld [vmem:[#allocation7] sm:$0xff]
    %v78 = vld [vmem:[#allocation7 + $0x8] sm:$0xff]
    %v79 = vld [vmem:[#allocation7 + $0x10] sm:$0xff]
    %v80 = vld [vmem:[#allocation7 + $0x18] sm:$0xff]
    %v81 = vsub.f32 %v73, %v77
    %v82 = vsub.f32 %v74, %v78
    %v83 = vsub.f32 %v75, %v79
    %v84 = vsub.f32 %v76, %v80
    %v85 = vld [vmem:[#allocation5] sm:$0xff]
    %v86 = vld [vmem:[#allocation5 + $0x8] sm:$0xff]
    %v87 = vld [vmem:[#allocation5 + $0x10] sm:$0xff]
    %v88 = vld [vmem:[#allocation5 + $0x18] sm:$0xff]
    %v89 = vld [vmem:[#allocation8] sm:$0xff]
    %v90 = vld [vmem:[#allocation8 + $0x8] sm:$0xff]
    %v91 = vld [vmem:[#allocation8 + $0x10] sm:$0xff]
    %v92 = vld [vmem:[#allocation8 + $0x18] sm:$0xff]
    %v93 = vsub.f32 %v85, %v89
    %v94 = vsub.f32 %v86, %v90
    %v95 = vsub.f32 %v87, %v91
    %v96 = vsub.f32 %v88, %v92
    %v97 = vmul.f32 %v81, %v81
    %v98 = vmul.f32 %v82, %v82
    %v99 = vmul.f32 %v83, %v83
    %v100 = vmul.f32 %v84, %v84
    %v101 = vmul.f32 %v93, %v93
    %v102 = vmul.f32 %v94, %v94
    %v103 = vmul.f32 %v95, %v95
    %v104 = vmul.f32 %v96, %v96
    %v105 = vadd.f32 %v97, %v101
    %v106 = vadd.f32 %v98, %v102
    %v107 = vadd.f32 %v99, %v103
    %v108 = vadd.f32 %v100, %v104
    %v109 = vrsqrt.pop %v105
    %v110 = vmul.f32 %v109, %v105
    %v111 = vmul.f32 %v110, %v109
    %v112 = vmul.f32 0.5, %v111
    %v113 = vsub.f32 1.5, %v112
    %v114 = vmul.f32 %v109, %v113
    %v115 = vmul.f32 %v105, %v114
    %vm116 = vcmp.eq.f32.partialorder %v105, inf
    %v117 = vsel %vm116, %v105, %v115
    %vm118 = vcmp.eq.f32.partialorder %v105, 0.0
    %v119 = vand.u32 %v105, 2147483648
    %v120 = vsel %vm118, %v119, %v117
    %v121 = vrsqrt.pop %v106
    %v122 = vmul.f32 %v121, %v106
    %v123 = vmul.f32 %v122, %v121
    %v124 = vmul.f32 0.5, %v123
    %v125 = vsub.f32 1.5, %v124
    %v126 = vmul.f32 %v121, %v125
    %v127 = vmul.f32 %v106, %v126
    %vm128 = vcmp.eq.f32.partialorder %v106, inf
    %v129 = vsel %vm128, %v106, %v127
    %vm130 = vcmp.eq.f32.partialorder %v106, 0.0
    %v131 = vand.u32 %v106, 2147483648
    %v132 = vsel %vm130, %v131, %v129
    %v133 = vrsqrt.pop %v107
    %v134 = vmul.f32 %v133, %v107
    %v135 = vmul.f32 %v134, %v133
    %v136 = vmul.f32 0.5, %v135
    %v137 = vsub.f32 1.5, %v136
    %v138 = vmul.f32 %v133, %v137
    %v139 = vmul.f32 %v107, %v138
    %vm140 = vcmp.eq.f32.partialorder %v107, inf
    %v141 = vsel %vm140, %v107, %v139
    %vm142 = vcmp.eq.f32.partialorder %v107, 0.0
    %v143 = vand.u32 %v107, 2147483648
    %v144 = vsel %vm142, %v143, %v141
    %v145 = vrsqrt.pop %v108
    %v146 = vmul.f32 %v145, %v108
    %v147 = vmul.f32 %v146, %v145
    %v148 = vmul.f32 0.5, %v147
    %v149 = vsub.f32 1.5, %v148
    %v150 = vmul.f32 %v145, %v149
    %v151 = vmul.f32 %v108, %v150
    %vm152 = vcmp.eq.f32.partialorder %v108, inf
    %v153 = vsel %vm152, %v108, %v151
    %vm154 = vcmp.eq.f32.partialorder %v108, 0.0
    %v155 = vand.u32 %v108, 2147483648
    %v156 = vsel %vm154, %v155, %v153
    %157 = vst [vmem:[#allocation10] sm:$0xff] %v120
    %158 = vst [vmem:[#allocation10 + $0x8] sm:$0xff] %v132
    %159 = vst [vmem:[#allocation10 + $0x10] sm:$0xff] %v144
    %160 = vst [vmem:[#allocation10 + $0x18] sm:$0xff] %v156
    // Predicated region
    $region34: #{tpu_custom_call.1} parent=1 // pred_check
      _
    $region35: #{tpu_custom_call.1} parent=1 // pred_check_branch
      %162 = sbr.rel (0) target = $region37
    $region36: #{tpu_custom_call.1} parent=1 // pred_region
      %164 = vsyncadd [#allocation4], 0
      %s166 = sshll.u32 [#allocation10], 4
      %s167 = int_to_ptr.vmem [resolvable:$true] %s166
      %s168 = sshll.u32 %s4, 4
      %s169 = int_to_ptr.hbm [resolvable:$true] %s168
      %171 = dma.vmem_to_hbm [thread:$0]  %s167, 512, %s169, [#allocation4]
    $region37: #{tpu_custom_call.1} parent=1 // pred_fallthru
      _
    // Predicated region
    $region38: #{tpu_custom_call.1} parent=1 // pred_check
      _
    $region39: #{tpu_custom_call.1} parent=1 // pred_check_branch
      %173 = sbr.rel (0) target = $region41
    $region40: #{tpu_custom_call.1} parent=1 // pred_region
      %175 = dma.done [#allocation4], 512
    $region41: #{tpu_custom_call.1} parent=1 // pred_fallthru
      _
    %176 = vsyncpa [#allocation3], 1
    %177 = vsyncpa [#allocation6], 1
    %178 = vsyncpa [#allocation9], 1
    %179 = vsyncpa [#allocation4], 1

</llo_original>
